<compile_context>
chip_gen: v6e
topology: v6e:2x2x1
jax: 0.10.0
libtpu: 0.0.40
codegen_flags: <defaults>
</compile_context>

<pallas_src>
import jax
import jax.numpy as jnp
import numpy as np
from jax.experimental import pallas as pl
from jax.experimental.pallas import tpu as pltpu


# --------------------------------------------------------------------------
# Kernel 1: per-channel image normalization  x * scale + bias
#   scale = 1/std, bias = -mean/std  (precomputed in the wrapper -> VPU FMA,
#   no per-element divide).  Tiled over the H*W lane axis for pipelining.
# --------------------------------------------------------------------------
def _normalize_kernel(x_ref, scale_ref, bias_ref, o_ref):
    # x_ref: (B*C, THW), scale/bias: (B*C, 1) -> broadcast over lanes
    o_ref[...] = x_ref[...] * scale_ref[...] + bias_ref[...]


def normalize_images(images, pixel_mean, pixel_std, *, max_hw_tile=512 * 128):
    """images: (B, C, H, W) float32; pixel_mean/std: (C,) float32."""
    B, C, H, W = images.shape
    BC, HW = B * C, H * W
    x = images.reshape(BC, HW)

    scale = jnp.tile((1.0 / pixel_std).reshape(C, 1), (B, 1))           # (BC, 1)
    bias = jnp.tile((-pixel_mean / pixel_std).reshape(C, 1), (B, 1))    # (BC, 1)

    # lane tile: full HW if small, else a large multiple of 128
    thw = HW if HW <= max_hw_tile else max_hw_tile
    n_hw = pl.cdiv(HW, thw)

    out = pl.pallas_call(
        _normalize_kernel,
        out_shape=jax.ShapeDtypeStruct((BC, HW), images.dtype),
        grid=(n_hw,),
        in_specs=[
            pl.BlockSpec((BC, thw), lambda i: (0, i)),
            pl.BlockSpec((BC, 1), lambda i: (0, 0)),
            pl.BlockSpec((BC, 1), lambda i: (0, 0)),
        ],
        out_specs=pl.BlockSpec((BC, thw), lambda i: (0, i)),
        compiler_params=pltpu.CompilerParams(
            dimension_semantics=("parallel",)),
    )(x, scale, bias)
    return out.reshape(B, C, H, W)


# --------------------------------------------------------------------------
# Kernel 2: semantic_inference (per HW tile)
#   probs_ref: (1, K, Qp)  bf16  -- softmax(mask_cls)[:, :-1] pre-transposed
#   mask_ref : (1, Qp, THW) bf16 -- upsampled mask logits
#   o_ref    : (1, K, THW)  f32  -- semseg = probs @ sigmoid(mask)
#   ("no-object" class already dropped in the wrapper; accumulation in f32)
# --------------------------------------------------------------------------
def _semantic_inference_kernel(probs_ref, mask_ref, o_ref):
    probs = probs_ref[0]                                       # (K, Qp) bf16
    sig = jax.nn.sigmoid(mask_ref[0].astype(jnp.float32))      # (Qp, THW) f32
    o_ref[0] = jnp.dot(probs, sig.astype(jnp.bfloat16),
                       preferred_element_type=jnp.float32)


def semantic_inference(mask_cls, mask_pred, *, max_hw_tile=8192):
    """mask_cls: (B, Q, K+1); mask_pred: (B, Q, H, W)  ->  (B, K, H, W)."""
    B, Q, Kp1 = mask_cls.shape
    _, _, H, W = mask_pred.shape
    K = Kp1 - 1
    HW = H * W

    # Hoist the class softmax, the no-object drop and the transpose out of the
    # per-HW-tile work (tiny (B, Q, K+1) tensor; plain JAX).
    probs = jax.nn.softmax(mask_cls.astype(jnp.float32), axis=-1)[..., :K]
    probs_t = jnp.swapaxes(probs, 1, 2)                        # (B, K, Q)

    # Pad Q (contraction dim) to a multiple of 8 once in HBM so Mosaic does
    # not re-pad every mask tile.  Padded probs rows are zero -> contribute 0.
    Qp = max(8, ((Q + 7) // 8) * 8)
    pad_q = Qp - Q
    mask_flat = mask_pred.reshape(B, Q, HW)
    if pad_q:
        probs_t = jnp.pad(probs_t, ((0, 0), (0, 0), (0, pad_q)))
        mask_flat = jnp.pad(mask_flat, ((0, 0), (0, pad_q), (0, 0)))

    # bf16 inputs: halves the dominant HBM read of the Q-channel masks and
    # uses the bf16-native MXU; the matmul accumulates in f32 in-kernel.
    probs_t = probs_t.astype(jnp.bfloat16)
    mask_flat = mask_flat.astype(jnp.bfloat16)

    # Tile the H*W lane axis (multiple of 128) -> pipelined, VMEM-safe at
    # production sizes (incl. v7x 64 MiB).
    thw = HW if HW <= max_hw_tile else max_hw_tile
    n_hw = pl.cdiv(HW, thw)

    out = pl.pallas_call(
        _semantic_inference_kernel,
        out_shape=jax.ShapeDtypeStruct((B, K, HW), jnp.float32),
        grid=(B, n_hw),
        in_specs=[
            # probs constant across the HW axis -> fetched once per batch
            pl.BlockSpec((1, K, Qp), lambda b, t: (b, 0, 0)),
            pl.BlockSpec((1, Qp, thw), lambda b, t: (b, 0, t)),
        ],
        out_specs=pl.BlockSpec((1, K, thw), lambda b, t: (b, 0, t)),
        compiler_params=pltpu.CompilerParams(
            dimension_semantics=("parallel", "parallel"),
            vmem_limit_bytes=64 * 1024 * 1024),
    )(probs_t, mask_flat)

    return out.reshape(B, K, H, W)


# --------------------------------------------------------------------------
# D2FP forward (inference path, semantic_on=True)
# --------------------------------------------------------------------------
def d2fp_forward(images, pixel_mean, pixel_std, mask_cls_results,
                 mask_pred_results):
    """Mirrors D2FP.forward (eval mode, semantic_on=True).

    images            : (B, C, H, W)   raw images, NCHW
    mask_cls_results  : (B, Q, K+1)    sem_seg_head pred_logits
    mask_pred_results : (B, Q, h, w)   sem_seg_head pred_masks (low-res)
    returns           : (images_norm (B,C,H,W), semseg (B, K, H, W))
    """
    B, C, H, W = images.shape

    # 1) normalization (Pallas kernel).  images_norm would feed the backbone.
    images_norm = normalize_images(images, pixel_mean, pixel_std)
    # TODO(synk): backbone + sem_seg_head are external detectron2 modules,
    # not defined in this file; their outputs are passed in directly.

    # 2) F.interpolate(..., mode='bilinear', align_corners=False) equivalent.
    Bq, Q, h, w = mask_pred_results.shape
    mask_pred_up = jax.image.resize(
        mask_pred_results, (Bq, Q, H, W), method="bilinear")
    # TODO(synk): fuse this bilinear upsample into the semantic-inference
    # kernel (separable Ry @ mask @ Rx^T per output tile) to remove the
    # full-resolution (B, Q, H, W) HBM round trip.

    # 3) semantic_inference (Pallas kernel: sigmoid + MXU matmul per HW tile).
    semseg = semantic_inference(mask_cls_results, mask_pred_up)
    # TODO(synk): instance_parsing_inference (topk / argsort / data-dependent
    # Python loops over instances) has no clean Pallas equivalent.
    return images_norm, semseg


# --------------------------------------------------------------------------
# Pure-JAX reference for correctness checking
# --------------------------------------------------------------------------
def _reference(images, pixel_mean, pixel_std, mask_cls, mask_pred):
    B, C, H, W = images.shape
    img_n = (images - pixel_mean.reshape(1, C, 1, 1)) / pixel_std.reshape(1, C, 1, 1)
    Bq, Q, h, w = mask_pred.shape
    mp = jax.image.resize(mask_pred, (Bq, Q, H, W), method="bilinear")
    cls = jax.nn.softmax(mask_cls, axis=-1)[..., :-1]          # (B, Q, K)
    sig = jax.nn.sigmoid(mp)                                   # (B, Q, H, W)
    semseg = jnp.einsum("bqc,bqhw->bchw", cls, sig)
    return img_n, semseg


if __name__ == "__main__":
    key = jax.random.PRNGKey(0)
    k1, k2, k3 = jax.random.split(key, 3)

    B, C, H, W = 2, 3, 16, 16        # small NCHW images
    Q = 8                            # num_queries
    K = 4                            # num_classes (+1 no-object)
    h, w = H // 4, W // 4            # low-res mask predictions

    images = jax.random.uniform(k1, (B, C, H, W), jnp.float32) * 255.0
    pixel_mean = jnp.array([123.675, 116.28, 103.53], jnp.float32)
    pixel_std = jnp.array([58.395, 57.12, 57.375], jnp.float32)

    # deterministic stand-ins for sem_seg_head outputs
    mask_cls_results = jax.random.normal(k2, (B, Q, K + 1), jnp.float32)
    mask_pred_results = jax.random.normal(k3, (B, Q, h, w), jnp.float32)

    images_norm, semseg = d2fp_forward(images, pixel_mean, pixel_std,
                                       mask_cls_results, mask_pred_results)
    images_norm = jax.block_until_ready(images_norm)
    semseg = jax.block_until_ready(semseg)

    ref_norm, ref_semseg = _reference(images, pixel_mean, pixel_std,
                                      mask_cls_results, mask_pred_results)
    ref_norm = jax.block_until_ready(ref_norm)
    ref_semseg = jax.block_until_ready(ref_semseg)

    # normalization: f32 FMA vs f32 divide -> tight tolerance
    np.testing.assert_allclose(np.asarray(images_norm), np.asarray(ref_norm),
                               rtol=1e-5, atol=1e-5)
    # semantic inference uses bf16 operands (f32 accumulation) -> bf16-level
    # tolerance vs the full-f32 reference.
    np.testing.assert_allclose(np.asarray(semseg), np.asarray(ref_semseg),
                               rtol=3e-2, atol=3e-2)
    assert semseg.shape == (B, K, H, W)
    print("KERNEL_OK")
</pallas_src>

<mosaic_0001>
module attributes {stable_mosaic.version = 11 : i64} {
  func.func @_normalize_kernel(%arg0: i32, %arg1: memref<6x256xf32, #tpu.memory_space<vmem>>, %arg2: memref<6x1xf32, #tpu.memory_space<vmem>>, %arg3: memref<6x1xf32, #tpu.memory_space<vmem>>, %arg4: memref<6x256xf32, #tpu.memory_space<vmem>>) attributes {dimension_semantics = [#tpu.dimension_semantics<parallel>], iteration_bounds = array<i64: 1>, scalar_prefetch = 0 : i64, scratch_operands = 0 : i64, tpu.core_type = #tpu.core_type<tc>, window_params = [{transform_indices = @transform_0, window_bounds = array<i64: 6, 256>}, {pipeline_mode = #tpu.pipeline_mode<synchronous>, transform_indices = @transform_1, window_bounds = array<i64: 6, 1>}, {pipeline_mode = #tpu.pipeline_mode<synchronous>, transform_indices = @transform_2, window_bounds = array<i64: 6, 1>}, {transform_indices = @transform_3, window_bounds = array<i64: 6, 256>}]} {
    %c0 = arith.constant 0 : index
    %c0_0 = arith.constant 0 : index
    %0 = vector.load %arg1[%c0, %c0_0] : memref<6x256xf32, #tpu.memory_space<vmem>>, vector<6x256xf32>
    %c0_1 = arith.constant 0 : index
    %c0_2 = arith.constant 0 : index
    %1 = vector.load %arg2[%c0_1, %c0_2] : memref<6x1xf32, #tpu.memory_space<vmem>>, vector<6x1xf32>
    %2 = vector.broadcast %1 : vector<6x1xf32> to vector<6x256xf32>
    %3 = arith.mulf %0, %2 : vector<6x256xf32>
    %c0_3 = arith.constant 0 : index
    %c0_4 = arith.constant 0 : index
    %4 = vector.load %arg3[%c0_3, %c0_4] : memref<6x1xf32, #tpu.memory_space<vmem>>, vector<6x1xf32>
    %5 = vector.broadcast %4 : vector<6x1xf32> to vector<6x256xf32>
    %6 = arith.addf %3, %5 : vector<6x256xf32>
    %c0_5 = arith.constant 0 : index
    %c0_6 = arith.constant 0 : index
    %7 = vector.load %arg4[%c0_5, %c0_6] : memref<6x256xf32, #tpu.memory_space<vmem>>, vector<6x256xf32>
    tpu.vector_store %arg4[%c0_5, %c0_6], %6 {strides = array<i32>} : memref<6x256xf32, #tpu.memory_space<vmem>>, vector<6x256xf32>,
    return
  }
  func.func @transform_0(%arg0: i32) -> (i32, i32) {
    %c0_i32 = arith.constant 0 : i32
    %c0_i32_0 = arith.constant 0 : i32
    return %c0_i32, %arg0 : i32, i32
  }
  func.func @transform_1(%arg0: i32) -> (i32, i32) {
    %c0_i32 = arith.constant 0 : i32
    %c0_i32_0 = arith.constant 0 : i32
    %c0_i32_1 = arith.constant 0 : i32
    return %c0_i32, %c0_i32_0 : i32, i32
  }
  func.func @transform_2(%arg0: i32) -> (i32, i32) {
    %c0_i32 = arith.constant 0 : i32
    %c0_i32_0 = arith.constant 0 : i32
    %c0_i32_1 = arith.constant 0 : i32
    return %c0_i32, %c0_i32_0 : i32, i32
  }
  func.func @transform_3(%arg0: i32) -> (i32, i32) {
    %c0_i32 = arith.constant 0 : i32
    %c0_i32_0 = arith.constant 0 : i32
    return %c0_i32, %arg0 : i32, i32
  }
}

</mosaic_0001>

<llo_original>
// kernel: tpu_custom_call.1
$region0: #{tpu_custom_call.1}
  #allocation0 [shape = 'u32[]', space=smem, size = 0x4, offset = 0x4, fixed_abs, tag = 'smem constant byte address 0x4 - core index']
  #allocation1 [shape = 'u32[144,128]{1,0:T(1,128)}', space=vmem, size = 0x12000, scoped, tag = 'internal scratch']
  %s0 = inlined_call_operand.vmem [shape: f32[6,256], index: 0, kind: input, shape index: {}]
  %s1 = inlined_call_operand.vmem [shape: f32[6,1], index: 1, kind: input, shape index: {}]
  %s2 = inlined_call_operand.vmem [shape: f32[6,1], index: 2, kind: input, shape index: {}]
  %s3 = inlined_call_operand.hbm [shape: f32[6,256], index: 3, kind: output, shape index: {}]
  %s4 = sld [smem:[#allocation0]]
  $region22: #{tpu_custom_call.1} parent=0
    _
  %s6 = ssub.s32 1, %s4
  %s7 = scalar_select 0, %s6, %s4
  $region1: #{tpu_custom_call.1} parent=0
    #allocation2 [shape = 'u8[8192]{0}', space=vmem, size = 0x2000, scoped, tag = 'output window, operand 0, single buffered']
    #allocation3 [shape = 's32[1]{0}', space=sflag, size = 0x4, scoped, tag = 'scoped memory for tpu_custom_call.1']
    %8 = vsyncpa [#allocation3], 0
    // Predicated region
    $region2: #{tpu_custom_call.1} parent=1 // pred_check
      _
    $region3: #{tpu_custom_call.1} parent=1 // pred_check_branch
      %10 = sbr.rel (0) target = $region5
    $region4: #{tpu_custom_call.1} parent=1 // pred_region
      _
    $region5: #{tpu_custom_call.1} parent=1 // pred_fallthru
      _
    // Predicated region
    $region6: #{tpu_custom_call.1} parent=1 // pred_check
      _
    $region7: #{tpu_custom_call.1} parent=1 // pred_check_branch
      %12 = sbr.rel (0) target = $region9
    $region8: #{tpu_custom_call.1} parent=1 // pred_region
      _
    $region9: #{tpu_custom_call.1} parent=1 // pred_fallthru
      _
    // Predicated region
    $region10: #{tpu_custom_call.1} parent=1 // pred_check
      _
    $region11: #{tpu_custom_call.1} parent=1 // pred_check_branch
      %14 = sbr.rel (0) target = $region13
    $region12: #{tpu_custom_call.1} parent=1 // pred_region
      _
    $region13: #{tpu_custom_call.1} parent=1 // pred_fallthru
      _
    %v15 = vld [vmem:[%s0] sm:$0x3f]
    %v16 = vld [vmem:[%s0 + $0x8] sm:$0x3f]
    %v17 = vld [vmem:[%s1] sm:$0x3f]
    %19 = vset.pattern.permute.xlu0 0
    %20 = vperm.xlu0 %19, %v17
    %v21 = vpop.permute.xlu0 %20
    %v23 = vmul.f32 %v15, %v21
    %v24 = vmul.f32 %v16, %v21
    %v25 = vld [vmem:[%s2] sm:$0x3f]
    %27 = vset.pattern.permute.xlu0 0
    %28 = vperm.xlu0 %27, %v25
    %v29 = vpop.permute.xlu0 %28
    %v31 = vadd.f32 %v23, %v29
    %v32 = vadd.f32 %v24, %v29
    %33 = vst [vmem:[#allocation2] sm:$0x3f] %v31
    %34 = vst [vmem:[#allocation2 + $0x8] sm:$0x3f] %v32
    // Predicated region
    $region14: #{tpu_custom_call.1} parent=1 // pred_check
      _
    $region15: #{tpu_custom_call.1} parent=1 // pred_check_branch
      %36 = sbr.rel (0) target = $region17
    $region16: #{tpu_custom_call.1} parent=1 // pred_region
      %s38 = ssub.s32 256, 256
      %39 = vsyncadd [#allocation3], %s38
      %s41 = sshll.u32 [#allocation2], 4
      %s42 = int_to_ptr.vmem [resolvable:$true] %s41
      %44 = dma.vmem_to_hbm [thread:$0]  %s42, 256, %s3, [#allocation3]
    $region17: #{tpu_custom_call.1} parent=1 // pred_fallthru
      _
    // Predicated region
    $region18: #{tpu_custom_call.1} parent=1 // pred_check
      _
    $region19: #{tpu_custom_call.1} parent=1 // pred_check_branch
      %46 = sbr.rel (0) target = $region21
    $region20: #{tpu_custom_call.1} parent=1 // pred_region
      %47 = dma.done [#allocation3], 256
    $region21: #{tpu_custom_call.1} parent=1 // pred_fallthru
      _
    %48 = vsyncpa [#allocation3], 1

</llo_original>
